<compile_context>
chip_gen: v5e
topology: v5e:2x2
jax: 0.10.0
libtpu: 0.0.40
codegen_flags: <defaults>
</compile_context>

<pallas_src>
import jax
import jax.numpy as jnp
from jax.experimental import pallas as pl
from jax.experimental.pallas import tpu as pltpu

FEAT = 784       # 28 * 28, used directly (no feature padding)
LANE_PAD = 128   # 10 -> 128 (lane-dense N for all layers)


def mlp_kernel(x_ref, w1_ref, b1_ref, w2_ref, b2_ref, w3_ref, b3_ref, o_ref):
    # x: (TB, 784) bf16; w1: (784, 128) bf16; w2, w3: (128, 128) f32; biases: (1, 128) f32
    h = jnp.dot(x_ref[...], w1_ref[...], preferred_element_type=jnp.float32) + b1_ref[...]
    h = jnp.maximum(h, 0.0)
    h = jnp.dot(h, w2_ref[...], preferred_element_type=jnp.float32) + b2_ref[...]
    h = jnp.maximum(h, 0.0)
    h = jnp.dot(h, w3_ref[...], preferred_element_type=jnp.float32) + b3_ref[...]
    o_ref[...] = h.astype(o_ref.dtype)


def _round_up(x, m):
    return (x + m - 1) // m * m


def _choose_tile(b8, max_tile_rows):
    """Pick a sublane-aligned (multiple-of-8) batch tile.

    Minimizes padded rows (avoids the up-to-2x blow-up for awkward B) and
    forces grid >= 2 whenever b8 > 8 so both v7x TensorCores are used.
    """
    max_tile_rows = max(8, (max_tile_rows // 8) * 8)
    if b8 <= 8:
        return 8
    cap = max(8, min(max_tile_rows, _round_up((b8 + 1) // 2, 8)))
    best_tb, best_pad = 8, b8
    for tb in range(8, cap + 1, 8):
        pad = _round_up(b8, tb)
        if pad < best_pad or (pad == best_pad and tb > best_tb):
            best_tb, best_pad = tb, pad
    return best_tb


def prepare_params(params):
    """One-time weight/bias prep: transpose, pad N to 128, cast layer-1 to bf16."""
    w1, b1, w2, b2, w3, b3 = params
    w1t = jnp.zeros((FEAT, LANE_PAD), jnp.bfloat16).at[:, :10].set(
        w1.T.astype(jnp.bfloat16))
    w2t = jnp.zeros((LANE_PAD, LANE_PAD), jnp.float32).at[:10, :10].set(w2.T)
    w3t = jnp.zeros((LANE_PAD, LANE_PAD), jnp.float32).at[:10, :10].set(w3.T)
    b1r = jnp.zeros((1, LANE_PAD), jnp.float32).at[0, :10].set(b1)
    b2r = jnp.zeros((1, LANE_PAD), jnp.float32).at[0, :10].set(b2)
    b3r = jnp.zeros((1, LANE_PAD), jnp.float32).at[0, :10].set(b3)
    return (w1t, b1r, w2t, b2r, w3t, b3r)


def neural_network_forward(x, prepared_params, *, max_tile_rows=2048):
    """x: (B, 1, 28, 28) or any (B, ...) flattening to 784 features."""
    B = x.shape[0]
    x2d = x.reshape(B, -1)  # torch.flatten(x, 1)
    assert x2d.shape[1] == FEAT
    x2d = x2d.astype(jnp.bfloat16)  # halves the dominant x HBM stream

    w1t, b1r, w2t, b2r, w3t, b3r = prepared_params

    b8 = _round_up(B, 8)
    tb = _choose_tile(b8, max_tile_rows)
    b_pad = _round_up(b8, tb)
    x_p = x2d if b_pad == B else jnp.pad(x2d, ((0, b_pad - B), (0, 0)))

    grid = (b_pad // tb,)
    out = pl.pallas_call(
        mlp_kernel,
        out_shape=jax.ShapeDtypeStruct((b_pad, LANE_PAD), jnp.float32),
        grid=grid,
        in_specs=[
            pl.BlockSpec((tb, FEAT), lambda i: (i, 0)),            # x tile (streamed)
            pl.BlockSpec((FEAT, LANE_PAD), lambda i: (0, 0)),      # w1 (resident, bf16)
            pl.BlockSpec((1, LANE_PAD), lambda i: (0, 0)),         # b1
            pl.BlockSpec((LANE_PAD, LANE_PAD), lambda i: (0, 0)),  # w2
            pl.BlockSpec((1, LANE_PAD), lambda i: (0, 0)),         # b2
            pl.BlockSpec((LANE_PAD, LANE_PAD), lambda i: (0, 0)),  # w3
            pl.BlockSpec((1, LANE_PAD), lambda i: (0, 0)),         # b3
        ],
        out_specs=pl.BlockSpec((tb, LANE_PAD), lambda i: (i, 0)),
        compiler_params=pltpu.CompilerParams(
            dimension_semantics=("parallel",),
        ),
    )(x_p, w1t, b1r, w2t, b2r, w3t, b3r)

    # TODO(synk): consumers that can take the padded (b_pad, 128) buffer directly
    # should skip this slice pass to save the output re-read.
    return out[:B, :10]


def init_params(key):
    # Deterministic init mimicking nn.Linear's uniform(-1/sqrt(in), 1/sqrt(in)).
    ks = jax.random.split(key, 6)

    def lin(kw, kb, out_f, in_f):
        bound = 1.0 / jnp.sqrt(in_f)
        w = jax.random.uniform(kw, (out_f, in_f), jnp.float32, -bound, bound)
        b = jax.random.uniform(kb, (out_f,), jnp.float32, -bound, bound)
        return w, b

    w1, b1 = lin(ks[0], ks[1], 10, 784)
    w2, b2 = lin(ks[2], ks[3], 10, 10)
    w3, b3 = lin(ks[4], ks[5], 10, 10)
    return (w1, b1, w2, b2, w3, b3)


def _reference(x, params):
    # Mirrors the kernel's mixed precision: layer-1 inputs quantized to bf16,
    # all accumulation/math in f32.
    hp = jax.lax.Precision.HIGHEST
    w1, b1, w2, b2, w3, b3 = params
    xf = x.reshape(x.shape[0], -1)
    x16 = xf.astype(jnp.bfloat16).astype(jnp.float32)
    w116 = w1.astype(jnp.bfloat16).astype(jnp.float32)
    r = jnp.maximum(jnp.dot(x16, w116.T, precision=hp) + b1, 0.0)
    r = jnp.maximum(jnp.dot(r, w2.T, precision=hp) + b2, 0.0)
    return jnp.dot(r, w3.T, precision=hp) + b3


if __name__ == "__main__":
    key = jax.random.PRNGKey(0)
    kx, kp, kx2 = jax.random.split(key, 3)
    params = init_params(kp)
    prepared = prepare_params(params)  # hoisted once, reused across calls

    # Small MNIST-shaped batch (NCHW): (2, 1, 28, 28) -> flatten -> 784.
    x = jax.random.normal(kx, (2, 1, 28, 28), dtype=jnp.float32)
    out = jax.block_until_ready(neural_network_forward(x, prepared))
    ref = _reference(x, params)
    assert out.shape == (2, 10)
    assert jnp.allclose(out, ref, atol=5e-3, rtol=5e-3), \
        float(jnp.max(jnp.abs(out - ref)))

    # Exercise the multi-step batch grid (grid > 1) with a forced small tile.
    x2 = jax.random.normal(kx2, (20, 1, 28, 28), dtype=jnp.float32)
    out2 = jax.block_until_ready(
        neural_network_forward(x2, prepared, max_tile_rows=8)
    )
    ref2 = _reference(x2, params)
    assert out2.shape == (20, 10)
    assert jnp.allclose(out2, ref2, atol=5e-3, rtol=5e-3), \
        float(jnp.max(jnp.abs(out2 - ref2)))

    print("KERNEL_OK")
</pallas_src>

<mosaic_0001>
module attributes {stable_mosaic.version = 11 : i64} {
  func.func @mlp_kernel(%arg0: i32, %arg1: memref<8x784xbf16, #tpu.memory_space<vmem>>, %arg2: memref<784x128xbf16, #tpu.memory_space<vmem>>, %arg3: memref<1x128xf32, #tpu.memory_space<vmem>>, %arg4: memref<128x128xf32, #tpu.memory_space<vmem>>, %arg5: memref<1x128xf32, #tpu.memory_space<vmem>>, %arg6: memref<128x128xf32, #tpu.memory_space<vmem>>, %arg7: memref<1x128xf32, #tpu.memory_space<vmem>>, %arg8: memref<8x128xf32, #tpu.memory_space<vmem>>) attributes {dimension_semantics = [#tpu.dimension_semantics<parallel>], iteration_bounds = array<i64: 1>, scalar_prefetch = 0 : i64, scratch_operands = 0 : i64, tpu.core_type = #tpu.core_type<tc>, window_params = [{transform_indices = @transform_0, window_bounds = array<i64: 8, 784>}, {pipeline_mode = #tpu.pipeline_mode<synchronous>, transform_indices = @transform_1, window_bounds = array<i64: 784, 128>}, {pipeline_mode = #tpu.pipeline_mode<synchronous>, transform_indices = @transform_2, window_bounds = array<i64: 1, 128>}, {pipeline_mode = #tpu.pipeline_mode<synchronous>, transform_indices = @transform_3, window_bounds = array<i64: 128, 128>}, {pipeline_mode = #tpu.pipeline_mode<synchronous>, transform_indices = @transform_4, window_bounds = array<i64: 1, 128>}, {pipeline_mode = #tpu.pipeline_mode<synchronous>, transform_indices = @transform_5, window_bounds = array<i64: 128, 128>}, {pipeline_mode = #tpu.pipeline_mode<synchronous>, transform_indices = @transform_6, window_bounds = array<i64: 1, 128>}, {transform_indices = @transform_7, window_bounds = array<i64: 8, 128>}]} {
    %c0 = arith.constant 0 : index
    %c0_0 = arith.constant 0 : index
    %0 = vector.load %arg1[%c0, %c0_0] : memref<8x784xbf16, #tpu.memory_space<vmem>>, vector<8x784xbf16>
    %c0_1 = arith.constant 0 : index
    %c0_2 = arith.constant 0 : index
    %1 = vector.load %arg2[%c0_1, %c0_2] : memref<784x128xbf16, #tpu.memory_space<vmem>>, vector<784x128xbf16>
    %cst = arith.constant dense<0.000000e+00> : vector<8x128xf32>
    %2 = tpu.matmul %0, %1, %cst {dimension_numbers = #tpu.dot_dimension_numbers<[1], [0], [0], [1], [0, 0, 1, 1], [], []>} : vector<8x784xbf16>, vector<784x128xbf16>, vector<8x128xf32> -> vector<8x128xf32>
    %c0_3 = arith.constant 0 : index
    %c0_4 = arith.constant 0 : index
    %3 = vector.load %arg3[%c0_3, %c0_4] : memref<1x128xf32, #tpu.memory_space<vmem>>, vector<1x128xf32>
    %4 = vector.broadcast %3 : vector<1x128xf32> to vector<8x128xf32>
    %5 = arith.addf %2, %4 : vector<8x128xf32>
    %cst_5 = arith.constant 0.000000e+00 : f32
    %6 = vector.broadcast %cst_5 : f32 to vector<8x128xf32>
    %7 = arith.maximumf %5, %6 : vector<8x128xf32>
    %c0_6 = arith.constant 0 : index
    %c0_7 = arith.constant 0 : index
    %8 = vector.load %arg4[%c0_6, %c0_7] : memref<128x128xf32, #tpu.memory_space<vmem>>, vector<128x128xf32>
    %cst_8 = arith.constant dense<0.000000e+00> : vector<8x128xf32>
    %9 = tpu.matmul %7, %8, %cst_8 {dimension_numbers = #tpu.dot_dimension_numbers<[1], [0], [0], [1], [0, 0, 1, 1], [], []>} : vector<8x128xf32>, vector<128x128xf32>, vector<8x128xf32> -> vector<8x128xf32>
    %c0_9 = arith.constant 0 : index
    %c0_10 = arith.constant 0 : index
    %10 = vector.load %arg5[%c0_9, %c0_10] : memref<1x128xf32, #tpu.memory_space<vmem>>, vector<1x128xf32>
    %11 = vector.broadcast %10 : vector<1x128xf32> to vector<8x128xf32>
    %12 = arith.addf %9, %11 : vector<8x128xf32>
    %cst_11 = arith.constant 0.000000e+00 : f32
    %13 = vector.broadcast %cst_11 : f32 to vector<8x128xf32>
    %14 = arith.maximumf %12, %13 : vector<8x128xf32>
    %c0_12 = arith.constant 0 : index
    %c0_13 = arith.constant 0 : index
    %15 = vector.load %arg6[%c0_12, %c0_13] : memref<128x128xf32, #tpu.memory_space<vmem>>, vector<128x128xf32>
    %cst_14 = arith.constant dense<0.000000e+00> : vector<8x128xf32>
    %16 = tpu.matmul %14, %15, %cst_14 {dimension_numbers = #tpu.dot_dimension_numbers<[1], [0], [0], [1], [0, 0, 1, 1], [], []>} : vector<8x128xf32>, vector<128x128xf32>, vector<8x128xf32> -> vector<8x128xf32>
    %c0_15 = arith.constant 0 : index
    %c0_16 = arith.constant 0 : index
    %17 = vector.load %arg7[%c0_15, %c0_16] : memref<1x128xf32, #tpu.memory_space<vmem>>, vector<1x128xf32>
    %18 = vector.broadcast %17 : vector<1x128xf32> to vector<8x128xf32>
    %19 = arith.addf %16, %18 : vector<8x128xf32>
    %c0_17 = arith.constant 0 : index
    %c0_18 = arith.constant 0 : index
    %20 = vector.load %arg8[%c0_17, %c0_18] : memref<8x128xf32, #tpu.memory_space<vmem>>, vector<8x128xf32>
    tpu.vector_store %arg8[%c0_17, %c0_18], %19 {strides = array<i32>} : memref<8x128xf32, #tpu.memory_space<vmem>>, vector<8x128xf32>,
    return
  }
  func.func @transform_0(%arg0: i32) -> (i32, i32) {
    %c0_i32 = arith.constant 0 : i32
    %c0_i32_0 = arith.constant 0 : i32
    return %arg0, %c0_i32 : i32, i32
  }
  func.func @transform_1(%arg0: i32) -> (i32, i32) {
    %c0_i32 = arith.constant 0 : i32
    %c0_i32_0 = arith.constant 0 : i32
    %c0_i32_1 = arith.constant 0 : i32
    return %c0_i32, %c0_i32_0 : i32, i32
  }
  func.func @transform_2(%arg0: i32) -> (i32, i32) {
    %c0_i32 = arith.constant 0 : i32
    %c0_i32_0 = arith.constant 0 : i32
    %c0_i32_1 = arith.constant 0 : i32
    return %c0_i32, %c0_i32_0 : i32, i32
  }
  func.func @transform_3(%arg0: i32) -> (i32, i32) {
    %c0_i32 = arith.constant 0 : i32
    %c0_i32_0 = arith.constant 0 : i32
    %c0_i32_1 = arith.constant 0 : i32
    return %c0_i32, %c0_i32_0 : i32, i32
  }
  func.func @transform_4(%arg0: i32) -> (i32, i32) {
    %c0_i32 = arith.constant 0 : i32
    %c0_i32_0 = arith.constant 0 : i32
    %c0_i32_1 = arith.constant 0 : i32
    return %c0_i32, %c0_i32_0 : i32, i32
  }
  func.func @transform_5(%arg0: i32) -> (i32, i32) {
    %c0_i32 = arith.constant 0 : i32
    %c0_i32_0 = arith.constant 0 : i32
    %c0_i32_1 = arith.constant 0 : i32
    return %c0_i32, %c0_i32_0 : i32, i32
  }
  func.func @transform_6(%arg0: i32) -> (i32, i32) {
    %c0_i32 = arith.constant 0 : i32
    %c0_i32_0 = arith.constant 0 : i32
    %c0_i32_1 = arith.constant 0 : i32
    return %c0_i32, %c0_i32_0 : i32, i32
  }
  func.func @transform_7(%arg0: i32) -> (i32, i32) {
    %c0_i32 = arith.constant 0 : i32
    %c0_i32_0 = arith.constant 0 : i32
    return %arg0, %c0_i32 : i32, i32
  }
}

</mosaic_0001>

<llo_original>
// kernel: tpu_custom_call.1
$region0: #{tpu_custom_call.1}
  #allocation0 [shape = 'u32[]', space=smem, size = 0x4, offset = 0x4, fixed_abs, tag = 'smem constant byte address 0x4 - core index']
  #allocation1 [shape = 'u32[72,128]{1,0:T(1,128)}', space=vmem, size = 0x9000, scoped, tag = 'internal scratch']
  %s0 = inlined_call_operand.hbm [shape: bf16[8,784], index: 0, kind: input, shape index: {}]
  %s1 = inlined_call_operand.hbm [shape: bf16[784,128], index: 1, kind: input, shape index: {}]
  %s2 = inlined_call_operand.vmem [shape: f32[1,128], index: 2, kind: input, shape index: {}]
  %s3 = inlined_call_operand.hbm [shape: f32[128,128], index: 3, kind: input, shape index: {}]
  %s4 = inlined_call_operand.vmem [shape: f32[1,128], index: 4, kind: input, shape index: {}]
  %s5 = inlined_call_operand.hbm [shape: f32[128,128], index: 5, kind: input, shape index: {}]
  %s6 = inlined_call_operand.vmem [shape: f32[1,128], index: 6, kind: input, shape index: {}]
  %s7 = inlined_call_operand.hbm [shape: f32[8,128], index: 7, kind: output, shape index: {}]
  %s8 = sld [smem:[#allocation0]]
  $region54: #{tpu_custom_call.1} parent=0
    _
  %s10 = ssub.s32 1, %s8
  %s11 = scalar_select 0, %s10, %s8
  $region1: #{tpu_custom_call.1} parent=0
    #allocation2 [shape = 'u8[14336]{0}', space=vmem, size = 0x3800, scoped, tag = 'input window, operand 0, single buffered']
    #allocation3 [shape = 's32[1]{0}', space=sflag, size = 0x4, scoped, tag = 'scoped memory for tpu_custom_call.1']
    #allocation4 [shape = 's32[1]{0}', space=sflag, size = 0x4, scoped, tag = 'scoped memory for tpu_custom_call.1']
    #allocation5 [shape = 'u8[200704]{0}', space=vmem, size = 0x31000, scoped, tag = 'input window, operand 1, single buffered']
    #allocation6 [shape = 's32[1]{0}', space=sflag, size = 0x4, scoped, tag = 'scoped memory for tpu_custom_call.1']
    #allocation7 [shape = 'u8[65536]{0}', space=vmem, size = 0x10000, scoped, tag = 'input window, operand 3, single buffered']
    #allocation8 [shape = 'u8[65536]{0}', space=vmem, size = 0x10000, scoped, tag = 'input window, operand 5, single buffered']
    #allocation9 [shape = 's32[1]{0}', space=sflag, size = 0x4, scoped, tag = 'scoped memory for tpu_custom_call.1']
    #allocation10 [shape = 'u8[4096]{0}', space=vmem, size = 0x1000, scoped, tag = 'output window, operand 0, single buffered']
    %12 = vsyncpa [#allocation3], 0
    %13 = vsyncpa [#allocation6], 0
    %14 = vsyncpa [#allocation9], 0
    %15 = vsyncpa [#allocation4], 0
    // Predicated region
    $region2: #{tpu_custom_call.1} parent=1 // pred_check
      _
    $region3: #{tpu_custom_call.1} parent=1 // pred_check_branch
      %17 = sbr.rel (0) target = $region5
    $region4: #{tpu_custom_call.1} parent=1 // pred_region
      %19 = vsyncadd [#allocation3], 0
      %s21 = sshll.u32 %s0, 4
      %s22 = int_to_ptr.hbm [resolvable:$true] %s21
      %s23 = sshll.u32 [#allocation2], 4
      %s24 = int_to_ptr.vmem [resolvable:$true] %s23
      %26 = dma.hbm_to_vmem [thread:$0]  %s22, 448, %s24, [#allocation3]
    $region5: #{tpu_custom_call.1} parent=1 // pred_fallthru
      _
    // Predicated region
    $region6: #{tpu_custom_call.1} parent=1 // pred_check
      _
    $region7: #{tpu_custom_call.1} parent=1 // pred_check_branch
      %28 = sbr.rel (0) target = $region9
    $region8: #{tpu_custom_call.1} parent=1 // pred_region
      %30 = vsyncadd [#allocation6], 0
      %s31 = sshll.u32 %s1, 4
      %s32 = int_to_ptr.hbm [resolvable:$true] %s31
      %s33 = sshll.u32 [#allocation5], 4
      %s34 = int_to_ptr.vmem [resolvable:$true] %s33
      %39 = dma.hbm_to_vmem [thread:$0]  %s32, 6272, %s34, [#allocation6], 64, 64, 4
    $region9: #{tpu_custom_call.1} parent=1 // pred_fallthru
      _
    // Predicated region
    $region10: #{tpu_custom_call.1} parent=1 // pred_check
      _
    $region11: #{tpu_custom_call.1} parent=1 // pred_check_branch
      %41 = sbr.rel (0) target = $region13
    $region12: #{tpu_custom_call.1} parent=1 // pred_region
      _
    $region13: #{tpu_custom_call.1} parent=1 // pred_fallthru
      _
    // Predicated region
    $region14: #{tpu_custom_call.1} parent=1 // pred_check
      _
    $region15: #{tpu_custom_call.1} parent=1 // pred_check_branch
      %43 = sbr.rel (0) target = $region17
    $region16: #{tpu_custom_call.1} parent=1 // pred_region
      %45 = vsyncadd [#allocation6], 0
      %s46 = sshll.u32 %s3, 4
      %s47 = int_to_ptr.hbm [resolvable:$true] %s46
      %s48 = sshll.u32 [#allocation7], 4
      %s49 = int_to_ptr.vmem [resolvable:$true] %s48
      %54 = dma.hbm_to_vmem [thread:$0]  %s47, 2048, %s49, [#allocation6], 128, 128, 8
    $region17: #{tpu_custom_call.1} parent=1 // pred_fallthru
      _
    // Predicated region
    $region18: #{tpu_custom_call.1} parent=1 // pred_check
      _
    $region19: #{tpu_custom_call.1} parent=1 // pred_check_branch
      %56 = sbr.rel (0) target = $region21
    $region20: #{tpu_custom_call.1} parent=1 // pred_region
      _
    $region21: #{tpu_custom_call.1} parent=1 // pred_fallthru
      _
    // Predicated region
    $region22: #{tpu_custom_call.1} parent=1 // pred_check
      _
    $region23: #{tpu_custom_call.1} parent=1 // pred_check_branch
      %58 = sbr.rel (0) target = $region25
    $region24: #{tpu_custom_call.1} parent=1 // pred_region
      %60 = vsyncadd [#allocation9], 0
      %s61 = sshll.u32 %s5, 4
      %s62 = int_to_ptr.hbm [resolvable:$true] %s61
      %s63 = sshll.u32 [#allocation8], 4
      %s64 = int_to_ptr.vmem [resolvable:$true] %s63
      %69 = dma.hbm_to_vmem [thread:$0]  %s62, 2048, %s64, [#allocation9], 128, 128, 8
    $region25: #{tpu_custom_call.1} parent=1 // pred_fallthru
      _
    // Predicated region
    $region26: #{tpu_custom_call.1} parent=1 // pred_check
      _
    $region27: #{tpu_custom_call.1} parent=1 // pred_check_branch
      %71 = sbr.rel (0) target = $region29
    $region28: #{tpu_custom_call.1} parent=1 // pred_region
      _
    $region29: #{tpu_custom_call.1} parent=1 // pred_fallthru
      _
    // Predicated region
    $region30: #{tpu_custom_call.1} parent=1 // pred_check
      _
    $region31: #{tpu_custom_call.1} parent=1 // pred_check_branch
      %73 = sbr.rel (0) target = $region33
    $region32: #{tpu_custom_call.1} parent=1 // pred_region
      %75 = dma.done [#allocation3], 448
    $region33: #{tpu_custom_call.1} parent=1 // pred_fallthru
      _
    // Predicated region
    $region34: #{tpu_custom_call.1} parent=1 // pred_check
      _
    $region35: #{tpu_custom_call.1} parent=1 // pred_check_branch
      %77 = sbr.rel (0) target = $region37
    $region36: #{tpu_custom_call.1} parent=1 // pred_region
      %79 = dma.done [#allocation6], 6272
    $region37: #{tpu_custom_call.1} parent=1 // pred_fallthru
      _
    // Predicated region
    $region38: #{tpu_custom_call.1} parent=1 // pred_check
      _
    $region39: #{tpu_custom_call.1} parent=1 // pred_check_branch
      %81 = sbr.rel (0) target = $region41
    $region40: #{tpu_custom_call.1} parent=1 // pred_region
      %83 = dma.done [#allocation6], 2048
    $region41: #{tpu_custom_call.1} parent=1 // pred_fallthru
      _
    // Predicated region
    $region42: #{tpu_custom_call.1} parent=1 // pred_check
      _
    $region43: #{tpu_custom_call.1} parent=1 // pred_check_branch
      %85 = sbr.rel (0) target = $region45
    $region44: #{tpu_custom_call.1} parent=1 // pred_region
      %87 = dma.done [#allocation9], 2048
    $region45: #{tpu_custom_call.1} parent=1 // pred_fallthru
      _
    %v89 = vld [vmem:[#allocation2] sm:$0xff]
    %v90 = vld [vmem:[#allocation2 + $0x8] sm:$0xff]
    %v91 = vld [vmem:[#allocation2 + $0x10] sm:$0xff]
    %v92 = vld [vmem:[#allocation2 + $0x18] sm:$0xf]
    %v93 = vld [vmem:[#allocation5] sm:$0xf]
    %v94 = vld [vmem:[#allocation5 + $0x4] sm:$0xf]
    %v95 = vld [vmem:[#allocation5 + $0x8] sm:$0xf]
    %v96 = vld [vmem:[#allocation5 + $0xc] sm:$0xf]
    %v97 = vld [vmem:[#allocation5 + $0x10] sm:$0xf]
    %v98 = vld [vmem:[#allocation5 + $0x14] sm:$0xf]
    %v99 = vld [vmem:[#allocation5 + $0x18] sm:$0xf]
    %v100 = vld [vmem:[#allocation5 + $0x1c] sm:$0xf]
    %v101 = vld [vmem:[#allocation5 + $0x20] sm:$0xf]
    %v102 = vld [vmem:[#allocation5 + $0x24] sm:$0xf]
    %v103 = vld [vmem:[#allocation5 + $0x28] sm:$0xf]
    %v104 = vld [vmem:[#allocation5 + $0x2c] sm:$0xf]
    %v105 = vld [vmem:[#allocation5 + $0x30] sm:$0xf]
    %v106 = vld [vmem:[#allocation5 + $0x34] sm:$0xf]
    %v107 = vld [vmem:[#allocation5 + $0x38] sm:$0xf]
    %v108 = vld [vmem:[#allocation5 + $0x3c] sm:$0xf]
    %v109 = vld [vmem:[#allocation5 + $0x40] sm:$0xf]
    %v110 = vld [vmem:[#allocation5 + $0x44] sm:$0xf]
    %v111 = vld [vmem:[#allocation5 + $0x48] sm:$0xf]
    %v112 = vld [vmem:[#allocation5 + $0x4c] sm:$0xf]
    %v113 = vld [vmem:[#allocation5 + $0x50] sm:$0xf]
    %v114 = vld [vmem:[#allocation5 + $0x54] sm:$0xf]
    %v115 = vld [vmem:[#allocation5 + $0x58] sm:$0xf]
    %v116 = vld [vmem:[#allocation5 + $0x5c] sm:$0xf]
    %v117 = vld [vmem:[#allocation5 + $0x60] sm:$0xf]
    %v118 = vld [vmem:[#allocation5 + $0x64] sm:$0xf]
    %v119 = vld [vmem:[#allocation5 + $0x68] sm:$0xf]
    %v120 = vld [vmem:[#allocation5 + $0x6c] sm:$0xf]
    %v121 = vld [vmem:[#allocation5 + $0x70] sm:$0xf]
    %v122 = vld [vmem:[#allocation5 + $0x74] sm:$0xf]
    %v123 = vld [vmem:[#allocation5 + $0x78] sm:$0xf]
    %v124 = vld [vmem:[#allocation5 + $0x7c] sm:$0xf]
    %v125 = vld [vmem:[#allocation5 + $0x80] sm:$0xf]
    %v126 = vld [vmem:[#allocation5 + $0x84] sm:$0xf]
    %v127 = vld [vmem:[#allocation5 + $0x88] sm:$0xf]
    %v128 = vld [vmem:[#allocation5 + $0x8c] sm:$0xf]
    %v129 = vld [vmem:[#allocation5 + $0x90] sm:$0xf]
    %v130 = vld [vmem:[#allocation5 + $0x94] sm:$0xf]
    %v131 = vld [vmem:[#allocation5 + $0x98] sm:$0xf]
    %v132 = vld [vmem:[#allocation5 + $0x9c] sm:$0xf]
    %v133 = vld [vmem:[#allocation5 + $0xa0] sm:$0xf]
    %v134 = vld [vmem:[#allocation5 + $0xa4] sm:$0xf]
    %v135 = vld [vmem:[#allocation5 + $0xa8] sm:$0xf]
    %v136 = vld [vmem:[#allocation5 + $0xac] sm:$0xf]
    %v137 = vld [vmem:[#allocation5 + $0xb0] sm:$0xf]
    %v138 = vld [vmem:[#allocation5 + $0xb4] sm:$0xf]
    %v139 = vld [vmem:[#allocation5 + $0xb8] sm:$0xf]
    %v140 = vld [vmem:[#allocation5 + $0xbc] sm:$0xf]
    %v141 = vld [vmem:[#allocation5 + $0xc0] sm:$0xf]
    %v142 = vld [vmem:[#allocation5 + $0xc4] sm:$0xf]
    %v143 = vld [vmem:[#allocation5 + $0xc8] sm:$0xf]
    %v144 = vld [vmem:[#allocation5 + $0xcc] sm:$0xf]
    %v145 = vld [vmem:[#allocation5 + $0xd0] sm:$0xf]
    %v146 = vld [vmem:[#allocation5 + $0xd4] sm:$0xf]
    %v147 = vld [vmem:[#allocation5 + $0xd8] sm:$0xf]
    %v148 = vld [vmem:[#allocation5 + $0xdc] sm:$0xf]
    %v149 = vld [vmem:[#allocation5 + $0xe0] sm:$0xf]
    %v150 = vld [vmem:[#allocation5 + $0xe4] sm:$0xf]
    %v151 = vld [vmem:[#allocation5 + $0xe8] sm:$0xf]
    %v152 = vld [vmem:[#allocation5 + $0xec] sm:$0xf]
    %v153 = vld [vmem:[#allocation5 + $0xf0] sm:$0xf]
    %v154 = vld [vmem:[#allocation5 + $0xf4] sm:$0xf]
    %v155 = vld [vmem:[#allocation5 + $0xf8] sm:$0xf]
    %v156 = vld [vmem:[#allocation5 + $0xfc] sm:$0xf]
    %v157 = vld [vmem:[#allocation5 + $0x100] sm:$0xf]
    %v158 = vld [vmem:[#allocation5 + $0x104] sm:$0xf]
    %v159 = vld [vmem:[#allocation5 + $0x108] sm:$0xf]
    %v160 = vld [vmem:[#allocation5 + $0x10c] sm:$0xf]
    %v161 = vld [vmem:[#allocation5 + $0x110] sm:$0xf]
    %v162 = vld [vmem:[#allocation5 + $0x114] sm:$0xf]
    %v163 = vld [vmem:[#allocation5 + $0x118] sm:$0xf]
    %v164 = vld [vmem:[#allocation5 + $0x11c] sm:$0xf]
    %v165 = vld [vmem:[#allocation5 + $0x120] sm:$0xf]
    %v166 = vld [vmem:[#allocation5 + $0x124] sm:$0xf]
    %v167 = vld [vmem:[#allocation5 + $0x128] sm:$0xf]
    %v168 = vld [vmem:[#allocation5 + $0x12c] sm:$0xf]
    %v169 = vld [vmem:[#allocation5 + $0x130] sm:$0xf]
    %v170 = vld [vmem:[#allocation5 + $0x134] sm:$0xf]
    %v171 = vld [vmem:[#allocation5 + $0x138] sm:$0xf]
    %v172 = vld [vmem:[#allocation5 + $0x13c] sm:$0xf]
    %v173 = vld [vmem:[#allocation5 + $0x140] sm:$0xf]
    %v174 = vld [vmem:[#allocation5 + $0x144] sm:$0xf]
    %v175 = vld [vmem:[#allocation5 + $0x148] sm:$0xf]
    %v176 = vld [vmem:[#allocation5 + $0x14c] sm:$0xf]
    %v177 = vld [vmem:[#allocation5 + $0x150] sm:$0xf]
    %v178 = vld [vmem:[#allocation5 + $0x154] sm:$0xf]
    %v179 = vld [vmem:[#allocation5 + $0x158] sm:$0xf]
    %v180 = vld [vmem:[#allocation5 + $0x15c] sm:$0xf]
    %v181 = vld [vmem:[#allocation5 + $0x160] sm:$0xf]
    %v182 = vld [vmem:[#allocation5 + $0x164] sm:$0xf]
    %v183 = vld [vmem:[#allocation5 + $0x168] sm:$0xf]
    %v184 = vld [vmem:[#allocation5 + $0x16c] sm:$0xf]
    %v185 = vld [vmem:[#allocation5 + $0x170] sm:$0xf]
    %v186 = vld [vmem:[#allocation5 + $0x174] sm:$0xf]
    %v187 = vld [vmem:[#allocation5 + $0x178] sm:$0xf]
    %v188 = vld [vmem:[#allocation5 + $0x17c] sm:$0xf]
    %v189 = vld [vmem:[#allocation5 + $0x180] sm:$0xf]
    %v190 = vld [vmem:[#allocation5 + $0x184] sm:$0xf]
    %v191 = vld [vmem:[%s2] sm:$0x1]
    %v193 = vperm.slane %v191, 0
    %v199 = vunpack.c.l.b16 %v89
    %v200 = vunpack.c.h.b16 %v89
    %v201 = vunpack.c.l.b16 %v90
    %v202 = vunpack.c.h.b16 %v90
    %v203 = vunpack.c.l.b16 %v91
    %v204 = vunpack.c.h.b16 %v91
    %v205 = vunpack.c.l.b16 %v92
    %v206 = vpack.c.b16 %v199, %v199
    %v207 = vpack.c.b16 %v200, %v200
    %v208 = vpack.c.b16 %v201, %v201
    %v209 = vpack.c.b16 %v202, %v202
    %v210 = vpack.c.b16 %v203, %v203
    %v211 = vpack.c.b16 %v204, %v204
    %v212 = vpack.c.b16 %v205, %v205
    %v317 = vunpack.c.l.b16 %v93
    %v318 = vunpack.c.l.b16 %v94
    %v319 = vunpack.c.l.b16 %v95
    %v320 = vunpack.c.l.b16 %v96
    %v321 = vunpack.c.l.b16 %v97
    %v322 = vunpack.c.l.b16 %v98
    %v323 = vunpack.c.l.b16 %v99
    %v324 = vunpack.c.l.b16 %v100
    %v325 = vunpack.c.l.b16 %v101
    %v326 = vunpack.c.l.b16 %v102
    %v327 = vunpack.c.l.b16 %v103
    %v328 = vunpack.c.l.b16 %v104
    %v329 = vunpack.c.l.b16 %v105
    %v330 = vunpack.c.l.b16 %v106
    %v331 = vunpack.c.l.b16 %v107
    %v332 = vunpack.c.l.b16 %v108
    %v333 = vunpack.c.l.b16 %v109
    %v334 = vunpack.c.l.b16 %v110
    %v335 = vunpack.c.l.b16 %v111
    %v336 = vunpack.c.l.b16 %v112
    %v337 = vunpack.c.l.b16 %v113
    %v338 = vunpack.c.l.b16 %v114
    %v339 = vunpack.c.l.b16 %v115
    %v340 = vunpack.c.l.b16 %v116
    %v341 = vunpack.c.l.b16 %v117
    %v342 = vunpack.c.l.b16 %v118
    %v343 = vunpack.c.l.b16 %v119
    %v344 = vunpack.c.l.b16 %v120
    %v345 = vunpack.c.l.b16 %v121
    %v346 = vunpack.c.l.b16 %v122
    %v347 = vunpack.c.l.b16 %v123
    %v348 = vunpack.c.l.b16 %v124
    %v349 = vunpack.c.l.b16 %v125
    %v350 = vunpack.c.l.b16 %v126
    %v351 = vunpack.c.l.b16 %v127
    %v352 = vunpack.c.l.b16 %v128
    %v353 = vunpack.c.l.b16 %v129
    %v354 = vunpack.c.l.b16 %v130
    %v355 = vunpack.c.l.b16 %v131
    %v356 = vunpack.c.l.b16 %v132
    %v357 = vunpack.c.l.b16 %v133
    %v358 = vunpack.c.l.b16 %v134
    %v359 = vunpack.c.l.b16 %v135
    %v360 = vunpack.c.l.b16 %v136
    %v361 = vunpack.c.l.b16 %v137
    %v362 = vunpack.c.l.b16 %v138
    %v363 = vunpack.c.l.b16 %v139
    %v364 = vunpack.c.l.b16 %v140
    %v365 = vunpack.c.l.b16 %v141
    %v366 = vunpack.c.l.b16 %v142
    %v367 = vunpack.c.l.b16 %v143
    %v368 = vunpack.c.l.b16 %v144
    %v369 = vunpack.c.l.b16 %v145
    %v370 = vunpack.c.l.b16 %v146
    %v371 = vunpack.c.l.b16 %v147
    %v372 = vunpack.c.l.b16 %v148
    %v373 = vunpack.c.l.b16 %v149
    %v374 = vunpack.c.l.b16 %v150
    %v375 = vunpack.c.l.b16 %v151
    %v376 = vunpack.c.l.b16 %v152
    %v377 = vunpack.c.l.b16 %v153
    %v378 = vunpack.c.l.b16 %v154
    %v379 = vunpack.c.l.b16 %v155
    %v380 = vunpack.c.l.b16 %v156
    %v381 = vunpack.c.l.b16 %v157
    %v382 = vunpack.c.l.b16 %v158
    %v383 = vunpack.c.l.b16 %v159
    %v384 = vunpack.c.l.b16 %v160
    %v385 = vunpack.c.l.b16 %v161
    %v386 = vunpack.c.l.b16 %v162
    %v387 = vunpack.c.l.b16 %v163
    %v388 = vunpack.c.l.b16 %v164
    %v389 = vunpack.c.l.b16 %v165
    %v390 = vunpack.c.l.b16 %v166
    %v391 = vunpack.c.l.b16 %v167
    %v392 = vunpack.c.l.b16 %v168
    %v393 = vunpack.c.l.b16 %v169
    %v394 = vunpack.c.l.b16 %v170
    %v395 = vunpack.c.l.b16 %v171
    %v396 = vunpack.c.l.b16 %v172
    %v397 = vunpack.c.l.b16 %v173
    %v398 = vunpack.c.l.b16 %v174
    %v399 = vunpack.c.l.b16 %v175
    %v400 = vunpack.c.l.b16 %v176
    %v401 = vunpack.c.l.b16 %v177
    %v402 = vunpack.c.l.b16 %v178
    %v403 = vunpack.c.l.b16 %v179
    %v404 = vunpack.c.l.b16 %v180
    %v405 = vunpack.c.l.b16 %v181
    %v406 = vunpack.c.l.b16 %v182
    %v407 = vunpack.c.l.b16 %v183
    %v408 = vunpack.c.l.b16 %v184
    %v409 = vunpack.c.l.b16 %v185
    %v410 = vunpack.c.l.b16 %v186
    %v411 = vunpack.c.l.b16 %v187
    %v412 = vunpack.c.l.b16 %v188
    %v413 = vunpack.c.l.b16 %v189
    %v414 = vunpack.c.l.b16 %v190
    %v415 = vpack.c.b16 %v318, %v317
    %v416 = vpack.c.b16 %v320, %v319
    %v417 = vpack.c.b16 %v322, %v321
    %v418 = vpack.c.b16 %v324, %v323
    %v419 = vpack.c.b16 %v326, %v325
    %v420 = vpack.c.b16 %v328, %v327
    %v421 = vpack.c.b16 %v330, %v329
    %v422 = vpack.c.b16 %v332, %v331
    %v423 = vpack.c.b16 %v334, %v333
    %v424 = vpack.c.b16 %v336, %v335
    %v425 = vpack.c.b16 %v338, %v337
    %v426 = vpack.c.b16 %v340, %v339
    %v427 = vpack.c.b16 %v342, %v341
    %v428 = vpack.c.b16 %v344, %v343
    %v429 = vpack.c.b16 %v346, %v345
    %v430 = vpack.c.b16 %v348, %v347
    %v431 = vpack.c.b16 %v350, %v349
    %v432 = vpack.c.b16 %v352, %v351
    %v433 = vpack.c.b16 %v354, %v353
    %v434 = vpack.c.b16 %v356, %v355
    %v435 = vpack.c.b16 %v358, %v357
    %v436 = vpack.c.b16 %v360, %v359
    %v437 = vpack.c.b16 %v362, %v361
    %v438 = vpack.c.b16 %v364, %v363
    %v439 = vpack.c.b16 %v366, %v365
    %v440 = vpack.c.b16 %v368, %v367
    %v441 = vpack.c.b16 %v370, %v369
    %v442 = vpack.c.b16 %v372, %v371
    %v443 = vpack.c.b16 %v374, %v373
    %v444 = vpack.c.b16 %v376, %v375
    %v445 = vpack.c.b16 %v378, %v377
    %v446 = vpack.c.b16 %v380, %v379
    %v447 = vpack.c.b16 %v382, %v381
    %v448 = vpack.c.b16 %v384, %v383
    %v449 = vpack.c.b16 %v386, %v385
    %v450 = vpack.c.b16 %v388, %v387
    %v451 = vpack.c.b16 %v390, %v389
    %v452 = vpack.c.b16 %v392, %v391
    %v453 = vpack.c.b16 %v394, %v393
    %v454 = vpack.c.b16 %v396, %v395
    %v455 = vpack.c.b16 %v398, %v397
    %v456 = vpack.c.b16 %v400, %v399
    %v457 = vpack.c.b16 %v402, %v401
    %v458 = vpack.c.b16 %v404, %v403
    %v459 = vpack.c.b16 %v406, %v405
    %v460 = vpack.c.b16 %v408, %v407
    %v461 = vpack.c.b16 %v410, %v409
    %v462 = vpack.c.b16 %v412, %v411
    %v463 = vpack.c.b16 %v414, %v413
    %vm513 = vcmask 130048
    %v515 = vsel %vm513, %v212, 0
    %517 = vmatpush.bf16.msra.mxu0 %v422
    %518 = vmatpush.bf16.msra.mxu0 %v421
    %519 = vmatpush.bf16.msra.mxu0 %v420
    %520 = vmatpush.bf16.msra.mxu0 %v419
    %521 = vmatpush.bf16.msra.mxu0 %v418
    %522 = vmatpush.bf16.msra.mxu0 %v417
    %523 = vmatpush.bf16.msra.mxu0 %v416
    %524 = vmatpush.bf16.msra.mxu0 %v415
    %525 = vmatmul.bf16.gmra.mxu0 %v206
    %v526 = vpop.f32.mrf.mxu0
    %v527 = vadd.f32 %v193, %v526
    %v528 = vpop.f32.mrf.mxu0
    %529 = vdwg.mxu0
    %530 = vmatpush.bf16.msra.mxu0 %v430
    %531 = vmatpush.bf16.msra.mxu0 %v429
    %532 = vmatpush.bf16.msra.mxu0 %v428
    %533 = vmatpush.bf16.msra.mxu0 %v427
    %534 = vmatpush.bf16.msra.mxu0 %v426
    %535 = vmatpush.bf16.msra.mxu0 %v425
    %536 = vmatpush.bf16.msra.mxu0 %v424
    %537 = vmatpush.bf16.msra.mxu0 %v423
    %538 = vmatmul.bf16.gmra.mxu0 %v207
    %v539 = vpop.f32.mrf.mxu0
    %v540 = vadd.f32 %v527, %v539
    %v541 = vpop.f32.mrf.mxu0
    %542 = vdwg.mxu0
    %543 = vmatpush.bf16.msra.mxu0 %v438
    %544 = vmatpush.bf16.msra.mxu0 %v437
    %545 = vmatpush.bf16.msra.mxu0 %v436
    %546 = vmatpush.bf16.msra.mxu0 %v435
    %547 = vmatpush.bf16.msra.mxu0 %v434
    %548 = vmatpush.bf16.msra.mxu0 %v433
    %549 = vmatpush.bf16.msra.mxu0 %v432
    %550 = vmatpush.bf16.msra.mxu0 %v431
    %551 = vmatmul.bf16.gmra.mxu0 %v208
    %v552 = vpop.f32.mrf.mxu0
    %v553 = vadd.f32 %v540, %v552
    %v554 = vpop.f32.mrf.mxu0
    %555 = vdwg.mxu0
    %556 = vmatpush.bf16.msra.mxu0 %v446
    %557 = vmatpush.bf16.msra.mxu0 %v445
    %558 = vmatpush.bf16.msra.mxu0 %v444
    %559 = vmatpush.bf16.msra.mxu0 %v443
    %560 = vmatpush.bf16.msra.mxu0 %v442
    %561 = vmatpush.bf16.msra.mxu0 %v441
    %562 = vmatpush.bf16.msra.mxu0 %v440
    %563 = vmatpush.bf16.msra.mxu0 %v439
    %564 = vmatmul.bf16.gmra.mxu0 %v209
    %v565 = vpop.f32.mrf.mxu0
    %v566 = vadd.f32 %v553, %v565
    %v567 = vpop.f32.mrf.mxu0
    %568 = vdwg.mxu0
    %569 = vmatpush.bf16.msra.mxu0 %v454
    %570 = vmatpush.bf16.msra.mxu0 %v453
    %571 = vmatpush.bf16.msra.mxu0 %v452
    %572 = vmatpush.bf16.msra.mxu0 %v451
    %573 = vmatpush.bf16.msra.mxu0 %v450
    %574 = vmatpush.bf16.msra.mxu0 %v449
    %575 = vmatpush.bf16.msra.mxu0 %v448
    %576 = vmatpush.bf16.msra.mxu0 %v447
    %577 = vmatmul.bf16.gmra.mxu0 %v210
    %v578 = vpop.f32.mrf.mxu0
    %v579 = vadd.f32 %v566, %v578
    %v580 = vpop.f32.mrf.mxu0
    %581 = vdwg.mxu0
    %582 = vmatpush.bf16.msra.mxu0 %v462
    %583 = vmatpush.bf16.msra.mxu0 %v461
    %584 = vmatpush.bf16.msra.mxu0 %v460
    %585 = vmatpush.bf16.msra.mxu0 %v459
    %586 = vmatpush.bf16.msra.mxu0 %v458
    %587 = vmatpush.bf16.msra.mxu0 %v457
    %588 = vmatpush.bf16.msra.mxu0 %v456
    %589 = vmatpush.bf16.msra.mxu0 %v455
    %590 = vmatmul.bf16.gmra.mxu0 %v211
    %v591 = vpop.f32.mrf.mxu0
    %v592 = vadd.f32 %v579, %v591
    %v593 = vpop.f32.mrf.mxu0
    %594 = vdwg.mxu0
    %595 = vmatpush.bf16.msra.mxu0 0
    %596 = vmatpush.bf16.msra.mxu0 0
    %597 = vmatpush.bf16.msra.mxu0 0
    %598 = vmatpush.bf16.msra.mxu0 0
    %599 = vmatpush.bf16.msra.mxu0 0
    %600 = vmatpush.bf16.msra.mxu0 0
    %601 = vmatpush.bf16.msra.mxu0 0
    %602 = vmatpush.bf16.msra.mxu0 %v463
    %603 = vmatmul.bf16.gmra.mxu0 %v515
    %v604 = vpop.f32.mrf.mxu0
    %v605 = vadd.f32 %v592, %v604
    %v606 = vpop.f32.mrf.mxu0
    %607 = vdwg.mxu0
    %v608 = vmax.f32 %v605, 0.0
    %v609 = vld [vmem:[#allocation7] sm:$0xff]
    %v610 = vld [vmem:[#allocation7 + $0x8] sm:$0xff]
    %v611 = vld [vmem:[#allocation7 + $0x10] sm:$0xff]
    %v612 = vld [vmem:[#allocation7 + $0x18] sm:$0xff]
    %v613 = vld [vmem:[#allocation7 + $0x20] sm:$0xff]
    %v614 = vld [vmem:[#allocation7 + $0x28] sm:$0xff]
    %v615 = vld [vmem:[#allocation7 + $0x30] sm:$0xff]
    %v616 = vld [vmem:[#allocation7 + $0x38] sm:$0xff]
    %v617 = vld [vmem:[#allocation7 + $0x40] sm:$0xff]
    %v618 = vld [vmem:[#allocation7 + $0x48] sm:$0xff]
    %v619 = vld [vmem:[#allocation7 + $0x50] sm:$0xff]
    %v620 = vld [vmem:[#allocation7 + $0x58] sm:$0xff]
    %v621 = vld [vmem:[#allocation7 + $0x60] sm:$0xff]
    %v622 = vld [vmem:[#allocation7 + $0x68] sm:$0xff]
    %v623 = vld [vmem:[#allocation7 + $0x70] sm:$0xff]
    %v624 = vld [vmem:[#allocation7 + $0x78] sm:$0xff]
    %v625 = vld [vmem:[%s4] sm:$0x1]
    %v627 = vperm.slane %v625, 0
    %629 = vmatpush.msra.mxu0 %v624
    %630 = vmatpush.msra.mxu0 %v623
    %631 = vmatpush.msra.mxu0 %v622
    %632 = vmatpush.msra.mxu0 %v621
    %633 = vmatpush.msra.mxu0 %v620
    %634 = vmatpush.msra.mxu0 %v619
    %635 = vmatpush.msra.mxu0 %v618
    %636 = vmatpush.msra.mxu0 %v617
    %637 = vmatpush.msra.mxu0 %v616
    %638 = vmatpush.msra.mxu0 %v615
    %639 = vmatpush.msra.mxu0 %v614
    %640 = vmatpush.msra.mxu0 %v613
    %641 = vmatpush.msra.mxu0 %v612
    %642 = vmatpush.msra.mxu0 %v611
    %643 = vmatpush.msra.mxu0 %v610
    %644 = vmatpush.msra.mxu0 %v609
    %645 = vmatmul.f32.gmra.mxu0 %v608
    %v646 = vpop.f32.mrf.mxu0
    %v647 = vadd.f32 %v627, %v646
    %648 = vdwg.mxu0
    %v649 = vmax.f32 %v647, 0.0
    %v650 = vld [vmem:[#allocation8] sm:$0xff]
    %v651 = vld [vmem:[#allocation8 + $0x8] sm:$0xff]
    %v652 = vld [vmem:[#allocation8 + $0x10] sm:$0xff]
    %v653 = vld [vmem:[#allocation8 + $0x18] sm:$0xff]
    %v654 = vld [vmem:[#allocation8 + $0x20] sm:$0xff]
    %v655 = vld [vmem:[#allocation8 + $0x28] sm:$0xff]
    %v656 = vld [vmem:[#allocation8 + $0x30] sm:$0xff]
    %v657 = vld [vmem:[#allocation8 + $0x38] sm:$0xff]
    %v658 = vld [vmem:[#allocation8 + $0x40] sm:$0xff]
    %v659 = vld [vmem:[#allocation8 + $0x48] sm:$0xff]
    %v660 = vld [vmem:[#allocation8 + $0x50] sm:$0xff]
    %v661 = vld [vmem:[#allocation8 + $0x58] sm:$0xff]
    %v662 = vld [vmem:[#allocation8 + $0x60] sm:$0xff]
    %v663 = vld [vmem:[#allocation8 + $0x68] sm:$0xff]
    %v664 = vld [vmem:[#allocation8 + $0x70] sm:$0xff]
    %v665 = vld [vmem:[#allocation8 + $0x78] sm:$0xff]
    %v666 = vld [vmem:[%s6] sm:$0x1]
    %v668 = vperm.slane %v666, 0
    %670 = vmatpush.msra.mxu0 %v665
    %671 = vmatpush.msra.mxu0 %v664
    %672 = vmatpush.msra.mxu0 %v663
    %673 = vmatpush.msra.mxu0 %v662
    %674 = vmatpush.msra.mxu0 %v661
    %675 = vmatpush.msra.mxu0 %v660
    %676 = vmatpush.msra.mxu0 %v659
    %677 = vmatpush.msra.mxu0 %v658
    %678 = vmatpush.msra.mxu0 %v657
    %679 = vmatpush.msra.mxu0 %v656
    %680 = vmatpush.msra.mxu0 %v655
    %681 = vmatpush.msra.mxu0 %v654
    %682 = vmatpush.msra.mxu0 %v653
    %683 = vmatpush.msra.mxu0 %v652
    %684 = vmatpush.msra.mxu0 %v651
    %685 = vmatpush.msra.mxu0 %v650
    %686 = vmatmul.f32.gmra.mxu0 %v649
    %v687 = vpop.f32.mrf.mxu0
    %v688 = vadd.f32 %v668, %v687
    %689 = vdwg.mxu0
    %690 = vst [vmem:[#allocation10] sm:$0xff] %v688
    // Predicated region
    $region46: #{tpu_custom_call.1} parent=1 // pred_check
      _
    $region47: #{tpu_custom_call.1} parent=1 // pred_check_branch
      %692 = sbr.rel (0) target = $region49
    $region48: #{tpu_custom_call.1} parent=1 // pred_region
      %694 = vsyncadd [#allocation4], 0
      %s696 = sshll.u32 [#allocation10], 4
      %s697 = int_to_ptr.vmem [resolvable:$true] %s696
      %s698 = sshll.u32 %s7, 4
      %s699 = int_to_ptr.hbm [resolvable:$true] %s698
      %701 = dma.vmem_to_hbm [thread:$0]  %s697, 128, %s699, [#allocation4]
    $region49: #{tpu_custom_call.1} parent=1 // pred_fallthru
      _
    // Predicated region
    $region50: #{tpu_custom_call.1} parent=1 // pred_check
      _
    $region51: #{tpu_custom_call.1} parent=1 // pred_check_branch
      %703 = sbr.rel (0) target = $region53
    $region52: #{tpu_custom_call.1} parent=1 // pred_region
      %705 = dma.done [#allocation4], 128
    $region53: #{tpu_custom_call.1} parent=1 // pred_fallthru
      _
    %706 = vsyncpa [#allocation3], 1
    %707 = vsyncpa [#allocation6], 1
    %708 = vsyncpa [#allocation9], 1
    %709 = vsyncpa [#allocation4], 1

</llo_original>
